<compile_context>
chip_gen: v7x
topology: tpu7x:2x2x1
jax: 0.10.0
libtpu: 0.0.40
codegen_flags: <defaults>
</compile_context>

<pallas_src>
import functools

import jax
import jax.numpy as jnp
from jax.experimental import pallas as pl
from jax.experimental.pallas import tpu as pltpu


def _round_up(a, m):
    return ((a + m - 1) // m) * m


def _resident_vmem_bytes(m_pad, tk, tn):
    # Double-buffered bf16 x / w tiles, double-buffered f32 output block
    # (which is also the accumulator), plus the gamma / beta rows.
    return (2 * m_pad * tk * 2        # x   (bf16)
            + 2 * tk * tn * 2         # w   (bf16)
            + 2 * m_pad * tn * 4      # out / acc (f32)
            + 2 * 2 * tn * 4)         # gamma, beta (f32)


def _fc_bn_relu_kernel(x_ref, w_ref, g_ref, beta_ref, o_ref, *, m_actual, eps):
    k = pl.program_id(1)

    # bf16 x bf16 -> f32 on the MXU for this K tile.
    part = jnp.dot(x_ref[...], w_ref[...], preferred_element_type=jnp.float32)

    # Accumulate directly into the f32 output block (VMEM-resident across k).
    @pl.when(k == 0)
    def _():
        o_ref[...] = part

    @pl.when(k != 0)
    def _():
        o_ref[...] += part

    # Epilogue on the last K step: batch stats + BN affine + ReLU, in place.
    @pl.when(k == pl.num_programs(1) - 1)
    def _():
        acc = o_ref[...]
        # Padded batch rows are exact zeros (x zero-padded), so plain sums
        # over the padded block divided by the real batch size are exact.
        inv_m = 1.0 / m_actual
        mean = jnp.sum(acc, axis=0, keepdims=True) * inv_m
        mean_sq = jnp.sum(acc * acc, axis=0, keepdims=True) * inv_m
        var = mean_sq - mean * mean                      # biased var (PyTorch BN)
        scale = jax.lax.rsqrt(var + eps) * g_ref[...]    # fold gamma into scale
        y = (acc - mean) * scale + beta_ref[...]
        o_ref[...] = jnp.maximum(y, 0.0).astype(o_ref.dtype)   # ReLU


def fc_bn_relu(x, w, b, gamma, beta, *, eps=1e-5, tn=None, tk=None):
    """Fused Linear + BatchNorm1d (training batch stats) + ReLU forward.

    x: (batch, in_dim), w: (in_dim, out_dim), b/gamma/beta: (out_dim,).
    Note: the Linear bias `b` cancels exactly under training-mode BatchNorm
    (the batch mean absorbs any per-channel constant), so it is unused here.
    """
    del b  # mathematically a no-op for the normalized output (see docstring)

    M, K = x.shape
    Kw, N = w.shape
    assert K == Kw
    assert gamma.shape == (N,) and beta.shape == (N,)

    # Lane/sublane-aligned padded sizes (M padded to 16 for bf16 sublanes).
    M_pad = _round_up(M, 16)
    N_pad = _round_up(N, 128)
    K_pad = _round_up(K, 128)

    # --- VMEM budget (per generation) -------------------------------------
    try:
        info = pltpu.get_tpu_info()
        vmem_cap = int(getattr(info, "vmem_capacity_bytes", 64 * 1024 * 1024))
    except Exception:  # conservative fallback (v7x has the smallest VMEM)
        vmem_cap = 64 * 1024 * 1024
    budget = int(vmem_cap * 0.70)          # leave headroom for Mosaic internals

    # --- Tile selection -----------------------------------------------------
    # tn: largest 128-multiple divisor of N_pad (<=512); keep the parallel grid
    # axis >= 2 steps when N_pad allows it (v7x has 2 TensorCores).
    if tn is None:
        tn = min(512, N_pad)
        while N_pad % tn != 0:
            tn -= 128
        if N_pad >= 256 and N_pad // tn < 2:
            cand = (N_pad // 2 // 128) * 128
            while cand >= 128 and N_pad % cand != 0:
                cand -= 128
            tn = max(cand, 128)
    assert tn % 128 == 0 and N_pad % tn == 0

    # tk: prefer the full K (x is then DMA'd from HBM exactly once); shrink only
    # if the resident set would blow the VMEM budget.
    if tk is None:
        tk = 128
        for c in range(K_pad // 128, 0, -1):
            cand = c * 128
            if K_pad % cand == 0 and _resident_vmem_bytes(M_pad, cand, tn) <= budget:
                tk = cand
                break
    assert tk % 128 == 0 and K_pad % tk == 0

    resident = _resident_vmem_bytes(M_pad, tk, tn)
    vmem_limit = int(min(vmem_cap * 0.9, max(2 * resident, 64 * 1024 * 1024)))

    # --- Inputs: bf16 for the MXU, pads only when actually needed -----------
    x_b = x.astype(jnp.bfloat16)
    if (M_pad, K_pad) != (M, K):
        x_b = jnp.pad(x_b, ((0, M_pad - M), (0, K_pad - K)))
    w_b = w.astype(jnp.bfloat16)
    if (K_pad, N_pad) != (K, N):
        w_b = jnp.pad(w_b, ((0, K_pad - K), (0, N_pad - N)))
    g_p = gamma.astype(jnp.float32)
    be_p = beta.astype(jnp.float32)
    if N_pad != N:
        g_p = jnp.pad(g_p, (0, N_pad - N), constant_values=1.0)
        be_p = jnp.pad(be_p, (0, N_pad - N))
    g_p = g_p.reshape(1, N_pad)
    be_p = be_p.reshape(1, N_pad)

    n_j = N_pad // tn
    n_k = K_pad // tk
    x_reads = 1 if tk == K_pad else n_j       # x re-fetched once per column tile
    bytes_accessed = (2 * M_pad * K_pad * x_reads   # x (bf16)
                      + 2 * K_pad * N_pad           # w (bf16)
                      + 4 * M_pad * N_pad           # out (f32)
                      + 2 * 4 * N_pad)              # gamma, beta

    kernel = functools.partial(_fc_bn_relu_kernel, m_actual=M, eps=eps)

    out_p = pl.pallas_call(
        kernel,
        out_shape=jax.ShapeDtypeStruct((M_pad, N_pad), jnp.float32),
        grid_spec=pltpu.PrefetchScalarGridSpec(
            num_scalar_prefetch=0,
            grid=(n_j, n_k),
            in_specs=[
                pl.BlockSpec((M_pad, tk), lambda j, k: (0, k)),  # x  (bf16)
                pl.BlockSpec((tk, tn),    lambda j, k: (k, j)),  # w  (bf16)
                pl.BlockSpec((1, tn),     lambda j, k: (0, j)),  # gamma
                pl.BlockSpec((1, tn),     lambda j, k: (0, j)),  # beta
            ],
            out_specs=pl.BlockSpec((M_pad, tn), lambda j, k: (0, j)),
        ),
        compiler_params=pltpu.CompilerParams(
            dimension_semantics=("parallel", "arbitrary"),
            vmem_limit_bytes=vmem_limit),
        cost_estimate=pl.CostEstimate(
            flops=2 * M * K * N,
            transcendentals=N,
            bytes_accessed=bytes_accessed),
    )(x_b, w_b, g_p, be_p)

    if (M_pad, N_pad) != (M, N):
        out_p = out_p[:M, :N]
    return out_p


if __name__ == "__main__":
    batch, in_dim, out_dim = 16, 32, 64

    key = jax.random.PRNGKey(0)
    kx, kw, kb, kg, kbt = jax.random.split(key, 5)

    bound = 1.0 / jnp.sqrt(jnp.float32(in_dim))
    x = jax.random.normal(kx, (batch, in_dim), dtype=jnp.float32)
    w = jax.random.uniform(kw, (in_dim, out_dim), jnp.float32, -bound, bound)
    b = jax.random.uniform(kb, (out_dim,), jnp.float32, -bound, bound)
    gamma = jax.random.uniform(kg, (out_dim,), jnp.float32, 0.5, 1.5)
    beta = jax.random.uniform(kbt, (out_dim,), jnp.float32, -0.1, 0.1)

    out = fc_bn_relu(x, w, b, gamma, beta)
    jax.block_until_ready(out)

    # Pure-JAX reference: Linear -> BatchNorm1d (training batch stats) -> ReLU.
    # The kernel feeds the MXU in bf16, so compare against the same bf16-rounded
    # inputs (f32 math) — the bias is included here and cancels under BN.
    xb = x.astype(jnp.bfloat16).astype(jnp.float32)
    wb = w.astype(jnp.bfloat16).astype(jnp.float32)
    z = xb @ wb + b
    mean = jnp.mean(z, axis=0, keepdims=True)
    var = jnp.var(z, axis=0, keepdims=True)          # biased variance
    ref = gamma * (z - mean) / jnp.sqrt(var + 1e-5) + beta
    ref = jnp.maximum(ref, 0.0)

    assert out.shape == ref.shape
    err = float(jnp.max(jnp.abs(out - ref)))
    assert jnp.allclose(out, ref, atol=5e-4, rtol=5e-4), f"max abs err {err}"

    print("KERNEL_OK")
</pallas_src>

<mosaic_0001>
module attributes {stable_mosaic.version = 11 : i64} {
  func.func @_fc_bn_relu_kernel(%arg0: i32, %arg1: i32, %arg2: memref<16x128xbf16, #tpu.memory_space<vmem>>, %arg3: memref<128x128xbf16, #tpu.memory_space<vmem>>, %arg4: memref<1x128xf32, #tpu.memory_space<vmem>>, %arg5: memref<1x128xf32, #tpu.memory_space<vmem>>, %arg6: memref<16x128xf32, #tpu.memory_space<vmem>>) attributes {dimension_semantics = [#tpu.dimension_semantics<parallel>, #tpu.dimension_semantics<arbitrary>], iteration_bounds = array<i64: 1, 1>, scalar_prefetch = 0 : i64, scratch_operands = 0 : i64, tpu.core_type = #tpu.core_type<tc>, window_params = [{transform_indices = @transform_0, window_bounds = array<i64: 16, 128>}, {transform_indices = @transform_1, window_bounds = array<i64: 128, 128>}, {transform_indices = @transform_2, window_bounds = array<i64: 1, 128>}, {transform_indices = @transform_3, window_bounds = array<i64: 1, 128>}, {transform_indices = @transform_4, window_bounds = array<i64: 16, 128>}]} {
    %c0 = arith.constant 0 : index
    %c0_0 = arith.constant 0 : index
    %0 = vector.load %arg2[%c0, %c0_0] : memref<16x128xbf16, #tpu.memory_space<vmem>>, vector<16x128xbf16>
    %c0_1 = arith.constant 0 : index
    %c0_2 = arith.constant 0 : index
    %1 = vector.load %arg3[%c0_1, %c0_2] : memref<128x128xbf16, #tpu.memory_space<vmem>>, vector<128x128xbf16>
    %cst = arith.constant dense<0.000000e+00> : vector<16x128xf32>
    %2 = tpu.matmul %0, %1, %cst {dimension_numbers = #tpu.dot_dimension_numbers<[1], [0], [0], [1], [0, 0, 1, 1], [], []>} : vector<16x128xbf16>, vector<128x128xbf16>, vector<16x128xf32> -> vector<16x128xf32>
    %c0_i32 = arith.constant 0 : i32
    %3 = arith.cmpi eq, %arg1, %c0_i32 : i32
    %4 = arith.extui %3 : i1 to i32
    %c0_i32_3 = arith.constant 0 : i32
    %5 = arith.cmpi ne, %4, %c0_i32_3 : i32
    scf.if %5 {
      %c0_8 = arith.constant 0 : index
      %c0_9 = arith.constant 0 : index
      %12 = vector.load %arg6[%c0_8, %c0_9] : memref<16x128xf32, #tpu.memory_space<vmem>>, vector<16x128xf32>
      tpu.vector_store %arg6[%c0_8, %c0_9], %2 {strides = array<i32>} : memref<16x128xf32, #tpu.memory_space<vmem>>, vector<16x128xf32>,
    } else {
    }
    %c0_i32_4 = arith.constant 0 : i32
    %6 = arith.cmpi ne, %arg1, %c0_i32_4 : i32
    %7 = arith.extui %6 : i1 to i32
    %c0_i32_5 = arith.constant 0 : i32
    %8 = arith.cmpi ne, %7, %c0_i32_5 : i32
    scf.if %8 {
      %c0_8 = arith.constant 0 : index
      %c0_9 = arith.constant 0 : index
      %12 = vector.load %arg6[%c0_8, %c0_9] : memref<16x128xf32, #tpu.memory_space<vmem>>, vector<16x128xf32>
      %13 = arith.addf %12, %2 : vector<16x128xf32>
      %c0_10 = arith.constant 0 : index
      %c0_11 = arith.constant 0 : index
      %14 = vector.load %arg6[%c0_10, %c0_11] : memref<16x128xf32, #tpu.memory_space<vmem>>, vector<16x128xf32>
      tpu.vector_store %arg6[%c0_10, %c0_11], %13 {strides = array<i32>} : memref<16x128xf32, #tpu.memory_space<vmem>>, vector<16x128xf32>,
    } else {
    }
    %c0_i32_6 = arith.constant 0 : i32
    %9 = arith.cmpi eq, %arg1, %c0_i32_6 : i32
    %10 = arith.extui %9 : i1 to i32
    %c0_i32_7 = arith.constant 0 : i32
    %11 = arith.cmpi ne, %10, %c0_i32_7 : i32
    scf.if %11 {
      %c0_8 = arith.constant 0 : index
      %c0_9 = arith.constant 0 : index
      %12 = vector.load %arg6[%c0_8, %c0_9] : memref<16x128xf32, #tpu.memory_space<vmem>>, vector<16x128xf32>
      %cst_10 = arith.constant dense<0.000000e+00> : vector<128xf32>
      %13 = vector.multi_reduction <add>, %12, %cst_10 [0] : vector<16x128xf32> to vector<128xf32>
      %14 = vector.shape_cast %13 : vector<128xf32> to vector<1x128xf32>
      %cst_11 = arith.constant 6.250000e-02 : f32
      %15 = vector.broadcast %cst_11 : f32 to vector<1x128xf32>
      %16 = arith.mulf %14, %15 : vector<1x128xf32>
      %17 = arith.mulf %12, %12 : vector<16x128xf32>
      %cst_12 = arith.constant dense<0.000000e+00> : vector<128xf32>
      %18 = vector.multi_reduction <add>, %17, %cst_12 [0] : vector<16x128xf32> to vector<128xf32>
      %19 = vector.shape_cast %18 : vector<128xf32> to vector<1x128xf32>
      %cst_13 = arith.constant 6.250000e-02 : f32
      %20 = vector.broadcast %cst_13 : f32 to vector<1x128xf32>
      %21 = arith.mulf %19, %20 : vector<1x128xf32>
      %22 = arith.mulf %16, %16 : vector<1x128xf32>
      %23 = arith.subf %21, %22 : vector<1x128xf32>
      %cst_14 = arith.constant 9.99999974E-6 : f32
      %24 = vector.broadcast %cst_14 : f32 to vector<1x128xf32>
      %25 = arith.addf %23, %24 : vector<1x128xf32>
      %26 = math.rsqrt %25 : vector<1x128xf32>
      %c0_15 = arith.constant 0 : index
      %c0_16 = arith.constant 0 : index
      %27 = vector.load %arg4[%c0_15, %c0_16] : memref<1x128xf32, #tpu.memory_space<vmem>>, vector<1x128xf32>
      %28 = arith.mulf %26, %27 : vector<1x128xf32>
      %29 = vector.broadcast %16 : vector<1x128xf32> to vector<16x128xf32>
      %30 = arith.subf %12, %29 : vector<16x128xf32>
      %31 = vector.broadcast %28 : vector<1x128xf32> to vector<16x128xf32>
      %32 = arith.mulf %30, %31 : vector<16x128xf32>
      %c0_17 = arith.constant 0 : index
      %c0_18 = arith.constant 0 : index
      %33 = vector.load %arg5[%c0_17, %c0_18] : memref<1x128xf32, #tpu.memory_space<vmem>>, vector<1x128xf32>
      %34 = vector.broadcast %33 : vector<1x128xf32> to vector<16x128xf32>
      %35 = arith.addf %32, %34 : vector<16x128xf32>
      %cst_19 = arith.constant 0.000000e+00 : f32
      %36 = vector.broadcast %cst_19 : f32 to vector<16x128xf32>
      %37 = arith.maximumf %35, %36 : vector<16x128xf32>
      %c0_20 = arith.constant 0 : index
      %c0_21 = arith.constant 0 : index
      %38 = vector.load %arg6[%c0_20, %c0_21] : memref<16x128xf32, #tpu.memory_space<vmem>>, vector<16x128xf32>
      tpu.vector_store %arg6[%c0_20, %c0_21], %37 {strides = array<i32>} : memref<16x128xf32, #tpu.memory_space<vmem>>, vector<16x128xf32>,
    } else {
    }
    return
  }
  func.func @transform_0(%arg0: i32, %arg1: i32) -> (i32, i32) {
    %c0_i32 = arith.constant 0 : i32
    %c0_i32_0 = arith.constant 0 : i32
    return %c0_i32, %arg1 : i32, i32
  }
  func.func @transform_1(%arg0: i32, %arg1: i32) -> (i32, i32) {
    %c0_i32 = arith.constant 0 : i32
    return %arg1, %arg0 : i32, i32
  }
  func.func @transform_2(%arg0: i32, %arg1: i32) -> (i32, i32) {
    %c0_i32 = arith.constant 0 : i32
    %c0_i32_0 = arith.constant 0 : i32
    return %c0_i32, %arg0 : i32, i32
  }
  func.func @transform_3(%arg0: i32, %arg1: i32) -> (i32, i32) {
    %c0_i32 = arith.constant 0 : i32
    %c0_i32_0 = arith.constant 0 : i32
    return %c0_i32, %arg0 : i32, i32
  }
  func.func @transform_4(%arg0: i32, %arg1: i32) -> (i32, i32) {
    %c0_i32 = arith.constant 0 : i32
    %c0_i32_0 = arith.constant 0 : i32
    return %c0_i32, %arg0 : i32, i32
  }
}

</mosaic_0001>

<llo_original>
// kernel: tpu_custom_call.1
$region0: #{tpu_custom_call.1}
  #allocation0 [shape = 'u32[]', space=smem, size = 0x4, offset = 0x4, fixed_abs, tag = 'smem constant byte address 0x4 - core index']
  #allocation1 [shape = 'u32[144,128]{1,0:T(1,128)}', space=vmem, size = 0x12000, scoped, tag = 'internal scratch']
  %s0 = inlined_call_operand.hbm [shape: bf16[16,128], index: 0, kind: input, shape index: {}]
  %s1 = inlined_call_operand.hbm [shape: bf16[128,128], index: 1, kind: input, shape index: {}]
  %s2 = inlined_call_operand.vmem [shape: f32[1,128], index: 2, kind: input, shape index: {}]
  %s3 = inlined_call_operand.vmem [shape: f32[1,128], index: 3, kind: input, shape index: {}]
  %s4 = inlined_call_operand.hbm [shape: f32[16,128], index: 4, kind: output, shape index: {}]
  %s5 = sld [smem:[#allocation0]]
  $region46: #{tpu_custom_call.1} parent=0
    _
  %s7 = ssub.s32 1, %s5
  %s8 = scalar_select 0, %s7, %s5
  $region1: #{tpu_custom_call.1} parent=0
    #allocation2 [shape = 'u8[4096]{0}', space=vmem, size = 0x1000, scoped, tag = 'input window, operand 0, single buffered']
    #allocation3 [shape = 's32[1]{0}', space=sflag, size = 0x4, scoped, tag = 'scoped memory for tpu_custom_call.1']
    #allocation4 [shape = 's32[1]{0}', space=sflag, size = 0x4, scoped, tag = 'scoped memory for tpu_custom_call.1']
    #allocation5 [shape = 'u8[32768]{0}', space=vmem, size = 0x8000, scoped, tag = 'input window, operand 1, single buffered']
    #allocation6 [shape = 's32[1]{0}', space=sflag, size = 0x4, scoped, tag = 'scoped memory for tpu_custom_call.1']
    #allocation7 [shape = 'u8[8192]{0}', space=vmem, size = 0x2000, scoped, tag = 'output window, operand 0, single buffered']
    %9 = vsyncpa [#allocation3], 0
    %10 = vsyncpa [#allocation6], 0
    %11 = vsyncpa [#allocation4], 0
    // Predicated region
    $region2: #{tpu_custom_call.1} parent=1 // pred_check
      _
    $region3: #{tpu_custom_call.1} parent=1 // pred_check_branch
      %13 = sbr.rel (0) target = $region5
    $region4: #{tpu_custom_call.1} parent=1 // pred_region
      %s15 = ssub.s32 128, 128
      %16 = vsyncadd [#allocation3], %s15
      %s17 = sshll.u32 [#allocation2], 4
      %s18 = int_to_ptr.vmem [resolvable:$true] %s17
      %23 = dma.hbm_to_vmem [thread:$0]  %s0, 128, %s18, [#allocation3], 64, 64, 4
    $region5: #{tpu_custom_call.1} parent=1 // pred_fallthru
      _
    // Predicated region
    $region6: #{tpu_custom_call.1} parent=1 // pred_check
      _
    $region7: #{tpu_custom_call.1} parent=1 // pred_check_branch
      %25 = sbr.rel (0) target = $region9
    $region8: #{tpu_custom_call.1} parent=1 // pred_region
      %s27 = ssub.s32 1024, 1024
      %28 = vsyncadd [#allocation6], %s27
      %s29 = sshll.u32 [#allocation5], 4
      %s30 = int_to_ptr.vmem [resolvable:$true] %s29
      %35 = dma.hbm_to_vmem [thread:$0]  %s1, 1024, %s30, [#allocation6], 64, 64, 4
    $region9: #{tpu_custom_call.1} parent=1 // pred_fallthru
      _
    // Predicated region
    $region10: #{tpu_custom_call.1} parent=1 // pred_check
      _
    $region11: #{tpu_custom_call.1} parent=1 // pred_check_branch
      %37 = sbr.rel (0) target = $region13
    $region12: #{tpu_custom_call.1} parent=1 // pred_region
      _
    $region13: #{tpu_custom_call.1} parent=1 // pred_fallthru
      _
    // Predicated region
    $region14: #{tpu_custom_call.1} parent=1 // pred_check
      _
    $region15: #{tpu_custom_call.1} parent=1 // pred_check_branch
      %39 = sbr.rel (0) target = $region17
    $region16: #{tpu_custom_call.1} parent=1 // pred_region
      _
    $region17: #{tpu_custom_call.1} parent=1 // pred_fallthru
      _
    // Predicated region
    $region18: #{tpu_custom_call.1} parent=1 // pred_check
      _
    $region19: #{tpu_custom_call.1} parent=1 // pred_check_branch
      %41 = sbr.rel (0) target = $region21
    $region20: #{tpu_custom_call.1} parent=1 // pred_region
      %42 = dma.done [#allocation3], 128
    $region21: #{tpu_custom_call.1} parent=1 // pred_fallthru
      _
    // Predicated region
    $region22: #{tpu_custom_call.1} parent=1 // pred_check
      _
    $region23: #{tpu_custom_call.1} parent=1 // pred_check_branch
      %44 = sbr.rel (0) target = $region25
    $region24: #{tpu_custom_call.1} parent=1 // pred_region
      %45 = dma.done [#allocation6], 1024
    $region25: #{tpu_custom_call.1} parent=1 // pred_fallthru
      _
    %v47 = vld [vmem:[#allocation2] sm:$0xf]
    %v48 = vld [vmem:[#allocation2 + $0x4] sm:$0xf]
    %v49 = vld [vmem:[#allocation5] sm:$0xf]
    %v50 = vld [vmem:[#allocation5 + $0x4] sm:$0xf]
    %v51 = vld [vmem:[#allocation5 + $0x8] sm:$0xf]
    %v52 = vld [vmem:[#allocation5 + $0xc] sm:$0xf]
    %v53 = vld [vmem:[#allocation5 + $0x10] sm:$0xf]
    %v54 = vld [vmem:[#allocation5 + $0x14] sm:$0xf]
    %v55 = vld [vmem:[#allocation5 + $0x18] sm:$0xf]
    %v56 = vld [vmem:[#allocation5 + $0x1c] sm:$0xf]
    %v57 = vld [vmem:[#allocation5 + $0x20] sm:$0xf]
    %v58 = vld [vmem:[#allocation5 + $0x24] sm:$0xf]
    %v59 = vld [vmem:[#allocation5 + $0x28] sm:$0xf]
    %v60 = vld [vmem:[#allocation5 + $0x2c] sm:$0xf]
    %v61 = vld [vmem:[#allocation5 + $0x30] sm:$0xf]
    %v62 = vld [vmem:[#allocation5 + $0x34] sm:$0xf]
    %v63 = vld [vmem:[#allocation5 + $0x38] sm:$0xf]
    %v64 = vld [vmem:[#allocation5 + $0x3c] sm:$0xf]
    %v67 = vunpack.c.l.b16 %v47
    %v68 = vunpack.c.l.b16 %v48
    %v69 = vpack.c.b16 %v68, %v67
    %v87 = vunpack.c.l.b16 %v49
    %v88 = vunpack.c.l.b16 %v50
    %v89 = vunpack.c.l.b16 %v51
    %v90 = vunpack.c.l.b16 %v52
    %v91 = vunpack.c.l.b16 %v53
    %v92 = vunpack.c.l.b16 %v54
    %v93 = vunpack.c.l.b16 %v55
    %v94 = vunpack.c.l.b16 %v56
    %v95 = vunpack.c.l.b16 %v57
    %v96 = vunpack.c.l.b16 %v58
    %v97 = vunpack.c.l.b16 %v59
    %v98 = vunpack.c.l.b16 %v60
    %v99 = vunpack.c.l.b16 %v61
    %v100 = vunpack.c.l.b16 %v62
    %v101 = vunpack.c.l.b16 %v63
    %v102 = vunpack.c.l.b16 %v64
    %v103 = vpack.c.b16 %v88, %v87
    %v104 = vpack.c.b16 %v90, %v89
    %v105 = vpack.c.b16 %v92, %v91
    %v106 = vpack.c.b16 %v94, %v93
    %v107 = vpack.c.b16 %v96, %v95
    %v108 = vpack.c.b16 %v98, %v97
    %v109 = vpack.c.b16 %v100, %v99
    %v110 = vpack.c.b16 %v102, %v101
    %119 = vmatprep.subr.bf16.mxu0 0
    %120 = vmatpush1.bf16.msra.mxu0 %v103
    %121 = vmatprep.subr.bf16.mxu0 0
    %122 = vmatpush1.bf16.msra.mxu0 %v104
    %123 = vmatprep.subr.bf16.mxu0 0
    %124 = vmatpush1.bf16.msra.mxu0 %v105
    %125 = vmatprep.subr.bf16.mxu0 0
    %126 = vmatpush1.bf16.msra.mxu0 %v106
    %127 = vmatprep.subr.bf16.mxu0 0
    %128 = vmatpush1.bf16.msra.mxu0 %v107
    %129 = vmatprep.subr.bf16.mxu0 0
    %130 = vmatpush1.bf16.msra.mxu0 %v108
    %131 = vmatprep.subr.bf16.mxu0 0
    %132 = vmatpush1.bf16.msra.mxu0 %v109
    %133 = vmatprep.subr.bf16.mxu0 0
    %134 = vmatpush1.bf16.msra.mxu0 %v110
    %135 = vmatprep.subr.bf16.mxu0 0
    %136 = vmatpush1.bf16.msra.mxu0 0
    %137 = vmatprep.subr.bf16.mxu0 0
    %138 = vmatpush1.bf16.msra.mxu0 0
    %139 = vmatprep.subr.bf16.mxu0 0
    %140 = vmatpush1.bf16.msra.mxu0 0
    %141 = vmatprep.subr.bf16.mxu0 0
    %142 = vmatpush1.bf16.msra.mxu0 0
    %143 = vmatprep.subr.bf16.mxu0 0
    %144 = vmatpush1.bf16.msra.mxu0 0
    %145 = vmatprep.subr.bf16.mxu0 0
    %146 = vmatpush1.bf16.msra.mxu0 0
    %147 = vmatprep.subr.bf16.mxu0 0
    %148 = vmatpush1.bf16.msra.mxu0 0
    %149 = vmatprep.subr.bf16.mxu0 0
    %150 = vmatpush1.bf16.msra.mxu0 0
    %151 = vmatprep.mubr.bf16.mxu0 0
    %152 = vmatmul.mubr.bf16.gmra.mrb[0].mxu0 %v69
    %v153 = vpop.f32.mrb[0].mxu0
    %v154 = vadd.f32 0.0, %v153
    %v155 = vpop.f32.mrb[0].mxu0
    %v156 = vpop.f32.mrb[0].mxu0
    %v157 = vadd.f32 0.0, %v156
    %v158 = vpop.f32.mrb[0].mxu0
    %159 = vdwg.mxu0
    %p160 = scmp.eq.s32.totalorder 0, 0
    // Predicated region
    $region26: #{tpu_custom_call.1} parent=1 // pred_check
      %p161 = pneg %p160
    $region27: #{tpu_custom_call.1} parent=1 // pred_check_branch
      %163 = sbr.rel (%p161) target = $region29
    $region28: #{tpu_custom_call.1} parent=1 // pred_region
      %164 = vst [vmem:[#allocation7] sm:$0xff] %v154
      %165 = vst [vmem:[#allocation7 + $0x8] sm:$0xff] %v157
    $region29: #{tpu_custom_call.1} parent=1 // pred_fallthru
      _
    %p166 = scmp.ne.s32.totalorder 0, 0
    // Predicated region
    $region30: #{tpu_custom_call.1} parent=1 // pred_check
      %p167 = pneg %p166
    $region31: #{tpu_custom_call.1} parent=1 // pred_check_branch
      %169 = sbr.rel (%p167) target = $region33
    $region32: #{tpu_custom_call.1} parent=1 // pred_region
      %v170 = vld [vmem:[#allocation7] sm:$0xff]
      %v171 = vld [vmem:[#allocation7 + $0x8] sm:$0xff]
      %v172 = vadd.f32 %v170, %v154
      %v173 = vadd.f32 %v171, %v157
      %174 = vst [vmem:[#allocation7] sm:$0xff] %v172
      %175 = vst [vmem:[#allocation7 + $0x8] sm:$0xff] %v173
    $region33: #{tpu_custom_call.1} parent=1 // pred_fallthru
      _
    // Predicated region
    $region34: #{tpu_custom_call.1} parent=1 // pred_check
      %p176 = pneg %p160
    $region35: #{tpu_custom_call.1} parent=1 // pred_check_branch
      %178 = sbr.rel (%p176) target = $region37
    $region36: #{tpu_custom_call.1} parent=1 // pred_region
      %v179 = vld [vmem:[#allocation7] sm:$0xff]
      %v180 = vld [vmem:[#allocation7 + $0x8] sm:$0xff]
      %v181 = vadd.f32 %v179, %v180
      %v182 = vrot.slane %v181, 4
      %v183 = vadd.f32 %v181, %v182
      %v184 = vrot.slane %v183, 2
      %v185 = vadd.f32 %v183, %v184
      %v186 = vrot.slane %v185, 1
      %v187 = vadd.f32 %v185, %v186
      %v188 = vmul.f32 %v187, 0.0625
      %v189 = vmul.f32 %v179, %v179
      %v190 = vmul.f32 %v180, %v180
      %v191 = vadd.f32 %v189, %v190
      %v192 = vrot.slane %v191, 4
      %v193 = vadd.f32 %v191, %v192
      %v194 = vrot.slane %v193, 2
      %v195 = vadd.f32 %v193, %v194
      %v196 = vrot.slane %v195, 1
      %v197 = vadd.f32 %v195, %v196
      %v198 = vmul.f32 %v197, 0.0625
      %v199 = vmul.f32 %v188, %v188
      %v200 = vsub.f32 %v198, %v199
      %v201 = vadd.f32 %v200, 1e-05
      %v202 = vrsqrt.pop %v201
      %v203 = vld [vmem:[%s2] sm:$0x1]
      %v204 = vmul.f32 %v202, %v203
      %v205 = vsub.f32 %v179, %v188
      %v206 = vsub.f32 %v180, %v188
      %v207 = vlaneseq
      %v208 = vshrl.u32 %v207, 7
      %v209 = vsub.s32 0, %v208
      %v210 = vrot.slane %v204, %v209
      %v211 = vmul.f32 %v205, %v210
      %v212 = vmul.f32 %v206, %v210
      %v213 = vld [vmem:[%s3] sm:$0x1]
      %v215 = vlaneseq
      %v216 = vshrl.u32 %v215, 7
      %v217 = vsub.s32 0, %v216
      %v218 = vrot.slane %v213, %v217
      %v220 = vadd.f32 %v211, %v218
      %v221 = vadd.f32 %v212, %v218
      %v222 = vmax.f32 %v220, 0.0
      %v223 = vmax.f32 %v221, 0.0
      %224 = vst [vmem:[#allocation7] sm:$0xff] %v222
      %225 = vst [vmem:[#allocation7 + $0x8] sm:$0xff] %v223
    $region37: #{tpu_custom_call.1} parent=1 // pred_fallthru
      _
    // Predicated region
    $region38: #{tpu_custom_call.1} parent=1 // pred_check
      _
    $region39: #{tpu_custom_call.1} parent=1 // pred_check_branch
      %227 = sbr.rel (0) target = $region41
    $region40: #{tpu_custom_call.1} parent=1 // pred_region
      %s229 = ssub.s32 256, 256
      %230 = vsyncadd [#allocation4], %s229
      %s231 = sshll.u32 [#allocation7], 4
      %s232 = int_to_ptr.vmem [resolvable:$true] %s231
      %237 = dma.vmem_to_hbm [thread:$0]  %s232, 256, %s4, [#allocation4], 128, 128, 8
    $region41: #{tpu_custom_call.1} parent=1 // pred_fallthru
      _
    // Predicated region
    $region42: #{tpu_custom_call.1} parent=1 // pred_check
      _
    $region43: #{tpu_custom_call.1} parent=1 // pred_check_branch
      %239 = sbr.rel (0) target = $region45
    $region44: #{tpu_custom_call.1} parent=1 // pred_region
      %240 = dma.done [#allocation4], 256
    $region45: #{tpu_custom_call.1} parent=1 // pred_fallthru
      _
    %241 = vsyncpa [#allocation3], 1
    %242 = vsyncpa [#allocation6], 1
    %243 = vsyncpa [#allocation4], 1

</llo_original>
